<compile_context>
chip_gen: v6e
topology: v6e:2x2x1
jax: 0.10.0
libtpu: 0.0.40
codegen_flags: <defaults>
</compile_context>

<pallas_src>
import jax
import jax.numpy as jnp
from jax.experimental import pallas as pl
from jax.experimental.pallas import tpu as pltpu


def glue_head_kernel(x_ref, w1_ref, s1_ref, b1_ref, w2_ref, b2_ref, o_ref):
    # x_ref:  (B, IN) f32      w1_ref: (IN, H) int8   s1_ref: (1, H) f32
    # b1_ref: (1, H)  f32      w2_ref: (1, H)  f32    b2_ref: (1, 1) f32
    # o_ref:  (B, 1)  f32
    x = x_ref[...].astype(jnp.bfloat16)

    # Weight-only dequant: int8 -> f32 -> bf16 (int8 values are exact in bf16;
    # the f32 hop keeps the cast path native on v5e which has no bf16 VPU).
    w1 = w1_ref[...].astype(jnp.float32).astype(jnp.bfloat16)

    # hidden_fc (MXU bf16 x bf16, f32 accumulate); per-column quant scale is
    # applied post-matmul on the small (B, H) activation tile, then bias + relu.
    h = jnp.dot(x, w1, preferred_element_type=jnp.float32)
    h = h * s1_ref[...] + b1_ref[...]
    h = jnp.maximum(h, 0.0)

    # output_layer (H -> 1): VPU multiply + XLU lane reduction (no N=1 matmul).
    y = jnp.sum(h * w2_ref[...], axis=-1, keepdims=True) + b2_ref[...]

    # sigmoid
    o_ref[...] = jax.nn.sigmoid(y).astype(o_ref.dtype)


def glue_head_forward(inputs, w1_i8, w1_scale, b1, w2_row, b2):
    """inputs: [B, S, IN] f32; w1_i8: [IN, H] int8; w1_scale: [1, H] f32 (per-column
    dequant scale); b1: [1, H] f32; w2_row: [1, H] f32; b2: [1, 1] f32.
    Returns sigmoid logits of shape [B] (torch .squeeze())."""
    B, S, IN = inputs.shape
    H = w1_i8.shape[1]

    # First-token selection in the wrapper: a tiny XLA slice is effectively
    # free and cuts the kernel's input DMA by S x, while handing the kernel a
    # (B, IN) tile that trivially satisfies the (8, 128) constraint.
    x0 = inputs[:, 0]  # (B, IN)

    bytes_accessed = (
        x0.size * 4            # sliced input, f32
        + w1_i8.size * 1       # int8 weights (dominant read)
        + w1_scale.size * 4
        + b1.size * 4
        + w2_row.size * 4
        + b2.size * 4
        + B * 4                # output
    )

    out = pl.pallas_call(
        glue_head_kernel,
        out_shape=jax.ShapeDtypeStruct((B, 1), jnp.float32),
        grid=(1,),
        in_specs=[
            pl.BlockSpec((B, IN), lambda i: (0, 0)),
            pl.BlockSpec((IN, H), lambda i: (0, 0)),
            pl.BlockSpec((1, H), lambda i: (0, 0)),
            pl.BlockSpec((1, H), lambda i: (0, 0)),
            pl.BlockSpec((1, H), lambda i: (0, 0)),
            pl.BlockSpec((1, 1), lambda i: (0, 0)),
        ],
        out_specs=pl.BlockSpec((B, 1), lambda i: (0, 0)),
        compiler_params=pltpu.CompilerParams(
            dimension_semantics=("arbitrary",),
        ),
        cost_estimate=pl.CostEstimate(
            flops=2 * B * IN * H + IN * H + 4 * B * H,
            transcendentals=B,
            bytes_accessed=bytes_accessed,
        ),
    )(x0, w1_i8, w1_scale, b1, w2_row, b2)
    # torch .squeeze(): (B, 1) -> (B,)
    return jnp.squeeze(out, axis=-1)


def quantize_w1_per_column(w1_f32):
    """Symmetric per-column int8 weight-only quantization: w1 ~= i8 * scale."""
    scale = jnp.max(jnp.abs(w1_f32), axis=0, keepdims=True) / 127.0  # (1, H)
    scale = jnp.maximum(scale, 1e-12)
    w1_i8 = jnp.clip(jnp.round(w1_f32 / scale), -127, 127).astype(jnp.int8)
    return w1_i8, scale.astype(jnp.float32)


if __name__ == "__main__":
    # Small-but-consistent shapes: batch=8, seq=4, input_size=512, hidden=1024, output=1.
    B, S, IN, H = 8, 4, 512, 1024

    key = jax.random.PRNGKey(0)
    k_in, k_w1, k_b1, k_w2, k_b2 = jax.random.split(key, 5)

    inputs = jax.random.normal(k_in, (B, S, IN), dtype=jnp.float32)

    # Deterministic synthetic parameters (nn.Linear-style small values).
    w1 = jax.random.uniform(k_w1, (IN, H), minval=-0.03, maxval=0.03, dtype=jnp.float32)
    b1 = jax.random.uniform(k_b1, (1, H), minval=-0.03, maxval=0.03, dtype=jnp.float32)
    w2_row = jax.random.uniform(k_w2, (1, H), minval=-0.03, maxval=0.03, dtype=jnp.float32)
    b2 = jax.random.uniform(k_b2, (1, 1), minval=-0.03, maxval=0.03, dtype=jnp.float32)

    # Weight-only int8 quantization of W1 (halves the kernel's dominant HBM read).
    w1_i8, w1_scale = quantize_w1_per_column(w1)

    y = glue_head_forward(inputs, w1_i8, w1_scale, b1, w2_row, b2)
    jax.block_until_ready(y)
    assert y.shape == (B,), y.shape

    # Reference 1: plain-JAX with matching int8-dequant + bf16 MXU precision
    # (f32 accumulate), identical math to the kernel.
    x0 = inputs[:, 0]
    w1_deq_bf16 = w1_i8.astype(jnp.float32).astype(jnp.bfloat16)
    h_ref = jnp.dot(x0.astype(jnp.bfloat16), w1_deq_bf16,
                    preferred_element_type=jnp.float32) * w1_scale + b1
    h_ref = jnp.maximum(h_ref, 0.0)
    ref = jax.nn.sigmoid(jnp.sum(h_ref * w2_row, axis=-1) + b2[0, 0])
    assert jnp.allclose(y, ref, atol=1e-4, rtol=1e-4), "mismatch vs quantized reference"

    # Reference 2: full-f32 math (semantic check vs the original torch module), loose tol
    # because the kernel intentionally uses bf16 activations and int8 weights.
    ref_f32 = jax.nn.sigmoid(jnp.maximum(x0 @ w1 + b1, 0.0) @ w2_row.T + b2)[:, 0]
    assert jnp.allclose(y, ref_f32, atol=3e-2), "semantic drift vs f32 reference"

    print("KERNEL_OK")
</pallas_src>

<mosaic_0001>
module attributes {stable_mosaic.version = 11 : i64} {
  func.func @glue_head_kernel(%arg0: i32, %arg1: memref<8x512xf32, #tpu.memory_space<vmem>>, %arg2: memref<512x1024xi8, #tpu.memory_space<vmem>>, %arg3: memref<1x1024xf32, #tpu.memory_space<vmem>>, %arg4: memref<1x1024xf32, #tpu.memory_space<vmem>>, %arg5: memref<1x1024xf32, #tpu.memory_space<vmem>>, %arg6: memref<1x1xf32, #tpu.memory_space<vmem>>, %arg7: memref<8x1xf32, #tpu.memory_space<vmem>>) attributes {dimension_semantics = [#tpu.dimension_semantics<arbitrary>], iteration_bounds = array<i64: 1>, scalar_prefetch = 0 : i64, scratch_operands = 0 : i64, tpu.core_type = #tpu.core_type<tc>, window_params = [{pipeline_mode = #tpu.pipeline_mode<synchronous>, transform_indices = @transform_0, window_bounds = array<i64: 8, 512>}, {pipeline_mode = #tpu.pipeline_mode<synchronous>, transform_indices = @transform_1, window_bounds = array<i64: 512, 1024>}, {pipeline_mode = #tpu.pipeline_mode<synchronous>, transform_indices = @transform_2, window_bounds = array<i64: 1, 1024>}, {pipeline_mode = #tpu.pipeline_mode<synchronous>, transform_indices = @transform_3, window_bounds = array<i64: 1, 1024>}, {pipeline_mode = #tpu.pipeline_mode<synchronous>, transform_indices = @transform_4, window_bounds = array<i64: 1, 1024>}, {pipeline_mode = #tpu.pipeline_mode<synchronous>, transform_indices = @transform_5, window_bounds = array<i64: 1, 1>}, {pipeline_mode = #tpu.pipeline_mode<synchronous>, transform_indices = @transform_6, window_bounds = array<i64: 8, 1>}]} {
    %c0 = arith.constant 0 : index
    %c0_0 = arith.constant 0 : index
    %0 = vector.load %arg1[%c0, %c0_0] : memref<8x512xf32, #tpu.memory_space<vmem>>, vector<8x512xf32>
    %1 = arith.truncf %0 : vector<8x512xf32> to vector<8x512xbf16>
    %c0_1 = arith.constant 0 : index
    %c0_2 = arith.constant 0 : index
    %2 = vector.load %arg2[%c0_1, %c0_2] : memref<512x1024xi8, #tpu.memory_space<vmem>>, vector<512x1024xi8>
    %3 = arith.sitofp %2 : vector<512x1024xi8> to vector<512x1024xf32>
    %4 = arith.truncf %3 : vector<512x1024xf32> to vector<512x1024xbf16>
    %cst = arith.constant dense<0.000000e+00> : vector<8x1024xf32>
    %5 = tpu.matmul %1, %4, %cst {dimension_numbers = #tpu.dot_dimension_numbers<[1], [0], [0], [1], [0, 0, 1, 1], [], []>} : vector<8x512xbf16>, vector<512x1024xbf16>, vector<8x1024xf32> -> vector<8x1024xf32>
    %c0_3 = arith.constant 0 : index
    %c0_4 = arith.constant 0 : index
    %6 = vector.load %arg3[%c0_3, %c0_4] : memref<1x1024xf32, #tpu.memory_space<vmem>>, vector<1x1024xf32>
    %7 = vector.broadcast %6 : vector<1x1024xf32> to vector<8x1024xf32>
    %8 = arith.mulf %5, %7 : vector<8x1024xf32>
    %c0_5 = arith.constant 0 : index
    %c0_6 = arith.constant 0 : index
    %9 = vector.load %arg4[%c0_5, %c0_6] : memref<1x1024xf32, #tpu.memory_space<vmem>>, vector<1x1024xf32>
    %10 = vector.broadcast %9 : vector<1x1024xf32> to vector<8x1024xf32>
    %11 = arith.addf %8, %10 : vector<8x1024xf32>
    %cst_7 = arith.constant 0.000000e+00 : f32
    %12 = vector.broadcast %cst_7 : f32 to vector<8x1024xf32>
    %13 = arith.maximumf %11, %12 : vector<8x1024xf32>
    %c0_8 = arith.constant 0 : index
    %c0_9 = arith.constant 0 : index
    %14 = vector.load %arg5[%c0_8, %c0_9] : memref<1x1024xf32, #tpu.memory_space<vmem>>, vector<1x1024xf32>
    %15 = vector.broadcast %14 : vector<1x1024xf32> to vector<8x1024xf32>
    %16 = arith.mulf %13, %15 : vector<8x1024xf32>
    %cst_10 = arith.constant dense<0.000000e+00> : vector<8xf32>
    %17 = vector.multi_reduction <add>, %16, %cst_10 [1] : vector<8x1024xf32> to vector<8xf32>
    %18 = vector.shape_cast %17 : vector<8xf32> to vector<8x1xf32>
    %c0_11 = arith.constant 0 : index
    %c0_12 = arith.constant 0 : index
    %19 = vector.load %arg6[%c0_11, %c0_12] : memref<1x1xf32, #tpu.memory_space<vmem>>, vector<1x1xf32>
    %20 = vector.broadcast %19 : vector<1x1xf32> to vector<8x1xf32>
    %21 = arith.addf %18, %20 : vector<8x1xf32>
    %22 = arith.negf %21 : vector<8x1xf32>
    %23 = math.exp %22 : vector<8x1xf32>
    %cst_13 = arith.constant 1.000000e+00 : f32
    %24 = vector.broadcast %cst_13 : f32 to vector<8x1xf32>
    %25 = arith.addf %24, %23 : vector<8x1xf32>
    %26 = arith.divf %24, %25 : vector<8x1xf32>
    %c0_14 = arith.constant 0 : index
    %c0_15 = arith.constant 0 : index
    %27 = vector.load %arg7[%c0_14, %c0_15] : memref<8x1xf32, #tpu.memory_space<vmem>>, vector<8x1xf32>
    tpu.vector_store %arg7[%c0_14, %c0_15], %26 {strides = array<i32>} : memref<8x1xf32, #tpu.memory_space<vmem>>, vector<8x1xf32>,
    return
  }
  func.func @transform_0(%arg0: i32) -> (i32, i32) {
    %c0_i32 = arith.constant 0 : i32
    %c0_i32_0 = arith.constant 0 : i32
    %c0_i32_1 = arith.constant 0 : i32
    return %c0_i32, %c0_i32_0 : i32, i32
  }
  func.func @transform_1(%arg0: i32) -> (i32, i32) {
    %c0_i32 = arith.constant 0 : i32
    %c0_i32_0 = arith.constant 0 : i32
    %c0_i32_1 = arith.constant 0 : i32
    return %c0_i32, %c0_i32_0 : i32, i32
  }
  func.func @transform_2(%arg0: i32) -> (i32, i32) {
    %c0_i32 = arith.constant 0 : i32
    %c0_i32_0 = arith.constant 0 : i32
    %c0_i32_1 = arith.constant 0 : i32
    return %c0_i32, %c0_i32_0 : i32, i32
  }
  func.func @transform_3(%arg0: i32) -> (i32, i32) {
    %c0_i32 = arith.constant 0 : i32
    %c0_i32_0 = arith.constant 0 : i32
    %c0_i32_1 = arith.constant 0 : i32
    return %c0_i32, %c0_i32_0 : i32, i32
  }
  func.func @transform_4(%arg0: i32) -> (i32, i32) {
    %c0_i32 = arith.constant 0 : i32
    %c0_i32_0 = arith.constant 0 : i32
    %c0_i32_1 = arith.constant 0 : i32
    return %c0_i32, %c0_i32_0 : i32, i32
  }
  func.func @transform_5(%arg0: i32) -> (i32, i32) {
    %c0_i32 = arith.constant 0 : i32
    %c0_i32_0 = arith.constant 0 : i32
    %c0_i32_1 = arith.constant 0 : i32
    return %c0_i32, %c0_i32_0 : i32, i32
  }
  func.func @transform_6(%arg0: i32) -> (i32, i32) {
    %c0_i32 = arith.constant 0 : i32
    %c0_i32_0 = arith.constant 0 : i32
    %c0_i32_1 = arith.constant 0 : i32
    return %c0_i32, %c0_i32_0 : i32, i32
  }
}

</mosaic_0001>

<llo_original>
// kernel: tpu_custom_call.1
$region0: #{tpu_custom_call.1}
  #allocation0 [shape = 'u32[]', space=smem, size = 0x4, offset = 0x4, fixed_abs, tag = 'smem constant byte address 0x4 - core index']
  #allocation1 [shape = 'u32[144,128]{1,0:T(1,128)}', space=vmem, size = 0x12000, scoped, tag = 'internal scratch']
  #allocation2 [shape = 'f32[1,1]{1,0:T(1,128)S(1)}', space=vmem, size = 0x200, scoped, tag = 'scoped memory for tpu_custom_call.1']
  %s0 = inlined_call_operand.hbm [shape: f32[8,512], index: 0, kind: input, shape index: {}]
  %s1 = inlined_call_operand.hbm [shape: s8[512,1024], index: 1, kind: input, shape index: {}]
  %s2 = inlined_call_operand.hbm [shape: f32[1,1024], index: 2, kind: input, shape index: {}]
  %s3 = inlined_call_operand.hbm [shape: f32[1,1024], index: 3, kind: input, shape index: {}]
  %s4 = inlined_call_operand.vmem [shape: f32[1,1024], index: 4, kind: input, shape index: {}]
  %s5 = inlined_call_operand.<no memory space> [shape: f32[1,1], index: 5, kind: input, shape index: {}]
  %s6 = inlined_call_operand.vmem [shape: f32[8,1], index: 6, kind: output, shape index: {}]
  %s7 = sld [smem:[#allocation0]]
  $region50: #{tpu_custom_call.1} parent=0
    _
  %s9 = ssub.s32 1, %s7
  %s10 = scalar_select 0, %s9, %s7
  %v11 = vstv %s5
  %12 = vst [vmem:[#allocation2] sm:$0x1] %v11
  $region1: #{tpu_custom_call.1} parent=0
    #allocation3 [shape = 'u8[16384]{0}', space=vmem, size = 0x4000, scoped, tag = 'input window, operand 0, single buffered']
    #allocation4 [shape = 's32[1]{0}', space=sflag, size = 0x4, scoped, tag = 'scoped memory for tpu_custom_call.1']
    #allocation5 [shape = 'u8[524288]{0}', space=vmem, size = 0x80000, scoped, tag = 'input window, operand 1, single buffered']
    #allocation6 [shape = 's32[1]{0}', space=sflag, size = 0x4, scoped, tag = 'scoped memory for tpu_custom_call.1']
    #allocation7 [shape = 'u8[4096]{0}', space=vmem, size = 0x1000, scoped, tag = 'input window, operand 2, single buffered']
    #allocation8 [shape = 'u8[4096]{0}', space=vmem, size = 0x1000, scoped, tag = 'input window, operand 3, single buffered']
    #allocation9 [shape = 's32[1]{0}', space=sflag, size = 0x4, scoped, tag = 'scoped memory for tpu_custom_call.1']
    %13 = vsyncpa [#allocation4], 0
    %14 = vsyncpa [#allocation6], 0
    %15 = vsyncpa [#allocation9], 0
    // Predicated region
    $region2: #{tpu_custom_call.1} parent=1 // pred_check
      _
    $region3: #{tpu_custom_call.1} parent=1 // pred_check_branch
      %17 = sbr.rel (0) target = $region5
    $region4: #{tpu_custom_call.1} parent=1 // pred_region
      %s19 = ssub.s32 512, 512
      %20 = vsyncadd [#allocation4], %s19
      %s22 = sshll.u32 [#allocation3], 4
      %s23 = int_to_ptr.vmem [resolvable:$true] %s22
      %25 = dma.hbm_to_vmem [thread:$0]  %s0, 512, %s23, [#allocation4]
    $region5: #{tpu_custom_call.1} parent=1 // pred_fallthru
      _
    // Predicated region
    $region6: #{tpu_custom_call.1} parent=1 // pred_check
      _
    $region7: #{tpu_custom_call.1} parent=1 // pred_check_branch
      %27 = sbr.rel (0) target = $region9
    $region8: #{tpu_custom_call.1} parent=1 // pred_region
      %s29 = ssub.s32 16384, 16384
      %30 = vsyncadd [#allocation6], %s29
      %s31 = sshll.u32 [#allocation5], 4
      %s32 = int_to_ptr.vmem [resolvable:$true] %s31
      %37 = dma.hbm_to_vmem [thread:$0]  %s1, 16384, %s32, [#allocation6], 1024, 1024, 64
    $region9: #{tpu_custom_call.1} parent=1 // pred_fallthru
      _
    // Predicated region
    $region10: #{tpu_custom_call.1} parent=1 // pred_check
      _
    $region11: #{tpu_custom_call.1} parent=1 // pred_check_branch
      %39 = sbr.rel (0) target = $region13
    $region12: #{tpu_custom_call.1} parent=1 // pred_region
      %s41 = ssub.s32 128, 128
      %42 = vsyncadd [#allocation6], %s41
      %s44 = sshll.u32 [#allocation7], 4
      %s45 = int_to_ptr.vmem [resolvable:$true] %s44
      %47 = dma.hbm_to_vmem [thread:$0]  %s2, 128, %s45, [#allocation6]
    $region13: #{tpu_custom_call.1} parent=1 // pred_fallthru
      _
    // Predicated region
    $region14: #{tpu_custom_call.1} parent=1 // pred_check
      _
    $region15: #{tpu_custom_call.1} parent=1 // pred_check_branch
      %49 = sbr.rel (0) target = $region17
    $region16: #{tpu_custom_call.1} parent=1 // pred_region
      %s51 = ssub.s32 128, 128
      %52 = vsyncadd [#allocation9], %s51
      %s54 = sshll.u32 [#allocation8], 4
      %s55 = int_to_ptr.vmem [resolvable:$true] %s54
      %57 = dma.hbm_to_vmem [thread:$0]  %s3, 128, %s55, [#allocation9]
    $region17: #{tpu_custom_call.1} parent=1 // pred_fallthru
      _
    // Predicated region
    $region18: #{tpu_custom_call.1} parent=1 // pred_check
      _
    $region19: #{tpu_custom_call.1} parent=1 // pred_check_branch
      %59 = sbr.rel (0) target = $region21
    $region20: #{tpu_custom_call.1} parent=1 // pred_region
      _
    $region21: #{tpu_custom_call.1} parent=1 // pred_fallthru
      _
    // Predicated region
    $region22: #{tpu_custom_call.1} parent=1 // pred_check
      _
    $region23: #{tpu_custom_call.1} parent=1 // pred_check_branch
      %61 = sbr.rel (0) target = $region25
    $region24: #{tpu_custom_call.1} parent=1 // pred_region
      _
    $region25: #{tpu_custom_call.1} parent=1 // pred_fallthru
      _
    // Predicated region
    $region26: #{tpu_custom_call.1} parent=1 // pred_check
      _
    $region27: #{tpu_custom_call.1} parent=1 // pred_check_branch
      %63 = sbr.rel (0) target = $region29
    $region28: #{tpu_custom_call.1} parent=1 // pred_region
      %64 = dma.done [#allocation4], 512
    $region29: #{tpu_custom_call.1} parent=1 // pred_fallthru
      _
    // Predicated region
    $region30: #{tpu_custom_call.1} parent=1 // pred_check
      _
    $region31: #{tpu_custom_call.1} parent=1 // pred_check_branch
      %66 = sbr.rel (0) target = $region33
    $region32: #{tpu_custom_call.1} parent=1 // pred_region
      %67 = dma.done [#allocation6], 16384
    $region33: #{tpu_custom_call.1} parent=1 // pred_fallthru
      _
    // Predicated region
    $region34: #{tpu_custom_call.1} parent=1 // pred_check
      _
    $region35: #{tpu_custom_call.1} parent=1 // pred_check_branch
      %69 = sbr.rel (0) target = $region37
    $region36: #{tpu_custom_call.1} parent=1 // pred_region
      %70 = dma.done [#allocation6], 128
    $region37: #{tpu_custom_call.1} parent=1 // pred_fallthru
      _
    // Predicated region
    $region38: #{tpu_custom_call.1} parent=1 // pred_check
      _
    $region39: #{tpu_custom_call.1} parent=1 // pred_check_branch
      %72 = sbr.rel (0) target = $region41
    $region40: #{tpu_custom_call.1} parent=1 // pred_region
      %73 = dma.done [#allocation9], 128
    $region41: #{tpu_custom_call.1} parent=1 // pred_fallthru
      _
    %v74 = vld [vmem:[#allocation3] sm:$0xff]
    %v75 = vld [vmem:[#allocation3 + $0x8] sm:$0xff]
    %v76 = vld [vmem:[#allocation3 + $0x10] sm:$0xff]
    %v77 = vld [vmem:[#allocation3 + $0x18] sm:$0xff]
    %v78 = vpack.c.bf16 %v74, %v74
    %v79 = vpack.c.bf16 %v75, %v75
    %v80 = vpack.c.bf16 %v76, %v76
    %v81 = vpack.c.bf16 %v77, %v77
    %v82 = vld [vmem:[#allocation5] sm:$0xff]
    %v83 = vld [vmem:[#allocation5 + $0x8] sm:$0xff]
    %v84 = vld [vmem:[#allocation5 + $0x10] sm:$0xff]
    %v85 = vld [vmem:[#allocation5 + $0x18] sm:$0xff]
    %v86 = vld [vmem:[#allocation5 + $0x20] sm:$0xff]
    %v87 = vld [vmem:[#allocation5 + $0x28] sm:$0xff]
    %v88 = vld [vmem:[#allocation5 + $0x30] sm:$0xff]
    %v89 = vld [vmem:[#allocation5 + $0x38] sm:$0xff]
    %v90 = vld [vmem:[#allocation5 + $0x40] sm:$0xff]
    %v91 = vld [vmem:[#allocation5 + $0x48] sm:$0xff]
    %v92 = vld [vmem:[#allocation5 + $0x50] sm:$0xff]
    %v93 = vld [vmem:[#allocation5 + $0x58] sm:$0xff]
    %v94 = vld [vmem:[#allocation5 + $0x60] sm:$0xff]
    %v95 = vld [vmem:[#allocation5 + $0x68] sm:$0xff]
    %v96 = vld [vmem:[#allocation5 + $0x70] sm:$0xff]
    %v97 = vld [vmem:[#allocation5 + $0x78] sm:$0xff]
    %v98 = vld [vmem:[#allocation5 + $0x80] sm:$0xff]
    %v99 = vld [vmem:[#allocation5 + $0x88] sm:$0xff]
    %v100 = vld [vmem:[#allocation5 + $0x90] sm:$0xff]
    %v101 = vld [vmem:[#allocation5 + $0x98] sm:$0xff]
    %v102 = vld [vmem:[#allocation5 + $0xa0] sm:$0xff]
    %v103 = vld [vmem:[#allocation5 + $0xa8] sm:$0xff]
    %v104 = vld [vmem:[#allocation5 + $0xb0] sm:$0xff]
    %v105 = vld [vmem:[#allocation5 + $0xb8] sm:$0xff]
    %v106 = vld [vmem:[#allocation5 + $0xc0] sm:$0xff]
    %v107 = vld [vmem:[#allocation5 + $0xc8] sm:$0xff]
    %v108 = vld [vmem:[#allocation5 + $0xd0] sm:$0xff]
    %v109 = vld [vmem:[#allocation5 + $0xd8] sm:$0xff]
    %v110 = vld [vmem:[#allocation5 + $0xe0] sm:$0xff]
    %v111 = vld [vmem:[#allocation5 + $0xe8] sm:$0xff]
    %v112 = vld [vmem:[#allocation5 + $0xf0] sm:$0xff]
    %v113 = vld [vmem:[#allocation5 + $0xf8] sm:$0xff]
    %v114 = vld [vmem:[#allocation5 + $0x100] sm:$0xff]
    %v115 = vld [vmem:[#allocation5 + $0x108] sm:$0xff]
    %v116 = vld [vmem:[#allocation5 + $0x110] sm:$0xff]
    %v117 = vld [vmem:[#allocation5 + $0x118] sm:$0xff]
    %v118 = vld [vmem:[#allocation5 + $0x120] sm:$0xff]
    %v119 = vld [vmem:[#allocation5 + $0x128] sm:$0xff]
    %v120 = vld [vmem:[#allocation5 + $0x130] sm:$0xff]
    %v121 = vld [vmem:[#allocation5 + $0x138] sm:$0xff]
    %v122 = vld [vmem:[#allocation5 + $0x140] sm:$0xff]
    %v123 = vld [vmem:[#allocation5 + $0x148] sm:$0xff]
    %v124 = vld [vmem:[#allocation5 + $0x150] sm:$0xff]
    %v125 = vld [vmem:[#allocation5 + $0x158] sm:$0xff]
    %v126 = vld [vmem:[#allocation5 + $0x160] sm:$0xff]
    %v127 = vld [vmem:[#allocation5 + $0x168] sm:$0xff]
    %v128 = vld [vmem:[#allocation5 + $0x170] sm:$0xff]
    %v129 = vld [vmem:[#allocation5 + $0x178] sm:$0xff]
    %v130 = vld [vmem:[#allocation5 + $0x180] sm:$0xff]
    %v131 = vld [vmem:[#allocation5 + $0x188] sm:$0xff]
    %v132 = vld [vmem:[#allocation5 + $0x190] sm:$0xff]
    %v133 = vld [vmem:[#allocation5 + $0x198] sm:$0xff]
    %v134 = vld [vmem:[#allocation5 + $0x1a0] sm:$0xff]
    %v135 = vld [vmem:[#allocation5 + $0x1a8] sm:$0xff]
    %v136 = vld [vmem:[#allocation5 + $0x1b0] sm:$0xff]
    %v137 = vld [vmem:[#allocation5 + $0x1b8] sm:$0xff]
    %v138 = vld [vmem:[#allocation5 + $0x1c0] sm:$0xff]
    %v139 = vld [vmem:[#allocation5 + $0x1c8] sm:$0xff]
    %v140 = vld [vmem:[#allocation5 + $0x1d0] sm:$0xff]
    %v141 = vld [vmem:[#allocation5 + $0x1d8] sm:$0xff]
    %v142 = vld [vmem:[#allocation5 + $0x1e0] sm:$0xff]
    %v143 = vld [vmem:[#allocation5 + $0x1e8] sm:$0xff]
    %v144 = vld [vmem:[#allocation5 + $0x1f0] sm:$0xff]
    %v145 = vld [vmem:[#allocation5 + $0x1f8] sm:$0xff]
    %v146 = vld [vmem:[#allocation5 + $0x200] sm:$0xff]
    %v147 = vld [vmem:[#allocation5 + $0x208] sm:$0xff]
    %v148 = vld [vmem:[#allocation5 + $0x210] sm:$0xff]
    %v149 = vld [vmem:[#allocation5 + $0x218] sm:$0xff]
    %v150 = vld [vmem:[#allocation5 + $0x220] sm:$0xff]
    %v151 = vld [vmem:[#allocation5 + $0x228] sm:$0xff]
    %v152 = vld [vmem:[#allocation5 + $0x230] sm:$0xff]
    %v153 = vld [vmem:[#allocation5 + $0x238] sm:$0xff]
    %v154 = vld [vmem:[#allocation5 + $0x240] sm:$0xff]
    %v155 = vld [vmem:[#allocation5 + $0x248] sm:$0xff]
    %v156 = vld [vmem:[#allocation5 + $0x250] sm:$0xff]
    %v157 = vld [vmem:[#allocation5 + $0x258] sm:$0xff]
    %v158 = vld [vmem:[#allocation5 + $0x260] sm:$0xff]
    %v159 = vld [vmem:[#allocation5 + $0x268] sm:$0xff]
    %v160 = vld [vmem:[#allocation5 + $0x270] sm:$0xff]
    %v161 = vld [vmem:[#allocation5 + $0x278] sm:$0xff]
    %v162 = vld [vmem:[#allocation5 + $0x280] sm:$0xff]
    %v163 = vld [vmem:[#allocation5 + $0x288] sm:$0xff]
    %v164 = vld [vmem:[#allocation5 + $0x290] sm:$0xff]
    %v165 = vld [vmem:[#allocation5 + $0x298] sm:$0xff]
    %v166 = vld [vmem:[#allocation5 + $0x2a0] sm:$0xff]
    %v167 = vld [vmem:[#allocation5 + $0x2a8] sm:$0xff]
    %v168 = vld [vmem:[#allocation5 + $0x2b0] sm:$0xff]
    %v169 = vld [vmem:[#allocation5 + $0x2b8] sm:$0xff]
    %v170 = vld [vmem:[#allocation5 + $0x2c0] sm:$0xff]
    %v171 = vld [vmem:[#allocation5 + $0x2c8] sm:$0xff]
    %v172 = vld [vmem:[#allocation5 + $0x2d0] sm:$0xff]
    %v173 = vld [vmem:[#allocation5 + $0x2d8] sm:$0xff]
    %v174 = vld [vmem:[#allocation5 + $0x2e0] sm:$0xff]
    %v175 = vld [vmem:[#allocation5 + $0x2e8] sm:$0xff]
    %v176 = vld [vmem:[#allocation5 + $0x2f0] sm:$0xff]
    %v177 = vld [vmem:[#allocation5 + $0x2f8] sm:$0xff]
    %v178 = vld [vmem:[#allocation5 + $0x300] sm:$0xff]
    %v179 = vld [vmem:[#allocation5 + $0x308] sm:$0xff]
    %v180 = vld [vmem:[#allocation5 + $0x310] sm:$0xff]
    %v181 = vld [vmem:[#allocation5 + $0x318] sm:$0xff]
    %v182 = vld [vmem:[#allocation5 + $0x320] sm:$0xff]
    %v183 = vld [vmem:[#allocation5 + $0x328] sm:$0xff]
    %v184 = vld [vmem:[#allocation5 + $0x330] sm:$0xff]
    %v185 = vld [vmem:[#allocation5 + $0x338] sm:$0xff]
    %v186 = vld [vmem:[#allocation5 + $0x340] sm:$0xff]
    %v187 = vld [vmem:[#allocation5 + $0x348] sm:$0xff]
    %v188 = vld [vmem:[#allocation5 + $0x350] sm:$0xff]
    %v189 = vld [vmem:[#allocation5 + $0x358] sm:$0xff]
    %v190 = vld [vmem:[#allocation5 + $0x360] sm:$0xff]
    %v191 = vld [vmem:[#allocation5 + $0x368] sm:$0xff]
    %v192 = vld [vmem:[#allocation5 + $0x370] sm:$0xff]
    %v193 = vld [vmem:[#allocation5 + $0x378] sm:$0xff]
    %v194 = vld [vmem:[#allocation5 + $0x380] sm:$0xff]
    %v195 = vld [vmem:[#allocation5 + $0x388] sm:$0xff]
    %v196 = vld [vmem:[#allocation5 + $0x390] sm:$0xff]
    %v197 = vld [vmem:[#allocation5 + $0x398] sm:$0xff]
    %v198 = vld [vmem:[#allocation5 + $0x3a0] sm:$0xff]
    %v199 = vld [vmem:[#allocation5 + $0x3a8] sm:$0xff]
    %v200 = vld [vmem:[#allocation5 + $0x3b0] sm:$0xff]
    %v201 = vld [vmem:[#allocation5 + $0x3b8] sm:$0xff]
    %v202 = vld [vmem:[#allocation5 + $0x3c0] sm:$0xff]
    %v203 = vld [vmem:[#allocation5 + $0x3c8] sm:$0xff]
    %v204 = vld [vmem:[#allocation5 + $0x3d0] sm:$0xff]
    %v205 = vld [vmem:[#allocation5 + $0x3d8] sm:$0xff]
    %v206 = vld [vmem:[#allocation5 + $0x3e0] sm:$0xff]
    %v207 = vld [vmem:[#allocation5 + $0x3e8] sm:$0xff]
    %v208 = vld [vmem:[#allocation5 + $0x3f0] sm:$0xff]
    %v209 = vld [vmem:[#allocation5 + $0x3f8] sm:$0xff]
    %v210 = vunpack.c.l.s8.bf16 %v82
    %v211 = vunpack.c.l.s8.bf16 %v83
    %v212 = vunpack.c.l.s8.bf16 %v84
    %v213 = vunpack.c.l.s8.bf16 %v85
    %v214 = vunpack.c.l.s8.bf16 %v86
    %v215 = vunpack.c.l.s8.bf16 %v87
    %v216 = vunpack.c.l.s8.bf16 %v88
    %v217 = vunpack.c.l.s8.bf16 %v89
    %v218 = vunpack.c.h.s8.bf16 %v82
    %v219 = vunpack.c.h.s8.bf16 %v83
    %v220 = vunpack.c.h.s8.bf16 %v84
    %v221 = vunpack.c.h.s8.bf16 %v85
    %v222 = vunpack.c.h.s8.bf16 %v86
    %v223 = vunpack.c.h.s8.bf16 %v87
    %v224 = vunpack.c.h.s8.bf16 %v88
    %v225 = vunpack.c.h.s8.bf16 %v89
    %v226 = vunpack.c.l.s8.bf16 %v90
    %v227 = vunpack.c.l.s8.bf16 %v91
    %v228 = vunpack.c.l.s8.bf16 %v92
    %v229 = vunpack.c.l.s8.bf16 %v93
    %v230 = vunpack.c.l.s8.bf16 %v94
    %v231 = vunpack.c.l.s8.bf16 %v95
    %v232 = vunpack.c.l.s8.bf16 %v96
    %v233 = vunpack.c.l.s8.bf16 %v97
    %v234 = vunpack.c.h.s8.bf16 %v90
    %v235 = vunpack.c.h.s8.bf16 %v91
    %v236 = vunpack.c.h.s8.bf16 %v92
    %v237 = vunpack.c.h.s8.bf16 %v93
    %v238 = vunpack.c.h.s8.bf16 %v94
    %v239 = vunpack.c.h.s8.bf16 %v95
    %v240 = vunpack.c.h.s8.bf16 %v96
    %v241 = vunpack.c.h.s8.bf16 %v97
    %v242 = vunpack.c.l.s8.bf16 %v98
    %v243 = vunpack.c.l.s8.bf16 %v99
    %v244 = vunpack.c.l.s8.bf16 %v100
    %v245 = vunpack.c.l.s8.bf16 %v101
    %v246 = vunpack.c.l.s8.bf16 %v102
    %v247 = vunpack.c.l.s8.bf16 %v103
    %v248 = vunpack.c.l.s8.bf16 %v104
    %v249 = vunpack.c.l.s8.bf16 %v105
    %v250 = vunpack.c.h.s8.bf16 %v98
    %v251 = vunpack.c.h.s8.bf16 %v99
    %v252 = vunpack.c.h.s8.bf16 %v100
    %v253 = vunpack.c.h.s8.bf16 %v101
    %v254 = vunpack.c.h.s8.bf16 %v102
    %v255 = vunpack.c.h.s8.bf16 %v103
    %v256 = vunpack.c.h.s8.bf16 %v104
    %v257 = vunpack.c.h.s8.bf16 %v105
    %v258 = vunpack.c.l.s8.bf16 %v106
    %v259 = vunpack.c.l.s8.bf16 %v107
    %v260 = vunpack.c.l.s8.bf16 %v108
    %v261 = vunpack.c.l.s8.bf16 %v109
    %v262 = vunpack.c.l.s8.bf16 %v110
    %v263 = vunpack.c.l.s8.bf16 %v111
    %v264 = vunpack.c.l.s8.bf16 %v112
    %v265 = vunpack.c.l.s8.bf16 %v113
    %v266 = vunpack.c.h.s8.bf16 %v106
    %v267 = vunpack.c.h.s8.bf16 %v107
    %v268 = vunpack.c.h.s8.bf16 %v108
    %v269 = vunpack.c.h.s8.bf16 %v109
    %v270 = vunpack.c.h.s8.bf16 %v110
    %v271 = vunpack.c.h.s8.bf16 %v111
    %v272 = vunpack.c.h.s8.bf16 %v112
    %v273 = vunpack.c.h.s8.bf16 %v113
    %v274 = vunpack.c.l.s8.bf16 %v114
    %v275 = vunpack.c.l.s8.bf16 %v115
    %v276 = vunpack.c.l.s8.bf16 %v116
    %v277 = vunpack.c.l.s8.bf16 %v117
    %v278 = vunpack.c.l.s8.bf16 %v118
    %v279 = vunpack.c.l.s8.bf16 %v119
    %v280 = vunpack.c.l.s8.bf16 %v120
    %v281 = vunpack.c.l.s8.bf16 %v121
    %v282 = vunpack.c.h.s8.bf16 %v114
    %v283 = vunpack.c.h.s8.bf16 %v115
    %v284 = vunpack.c.h.s8.bf16 %v116
    %v285 = vunpack.c.h.s8.bf16 %v117
    %v286 = vunpack.c.h.s8.bf16 %v118
    %v287 = vunpack.c.h.s8.bf16 %v119
    %v288 = vunpack.c.h.s8.bf16 %v120
    %v289 = vunpack.c.h.s8.bf16 %v121
    %v290 = vunpack.c.l.s8.bf16 %v122
    %v291 = vunpack.c.l.s8.bf16 %v123
    %v292 = vunpack.c.l.s8.bf16 %v124
    %v293 = vunpack.c.l.s8.bf16 %v125
    %v294 = vunpack.c.l.s8.bf16 %v126
    %v295 = vunpack.c.l.s8.bf16 %v127
    %v296 = vunpack.c.l.s8.bf16 %v128
    %v297 = vunpack.c.l.s8.bf16 %v129
    %v298 = vunpack.c.h.s8.bf16 %v122
    %v299 = vunpack.c.h.s8.bf16 %v123
    %v300 = vunpack.c.h.s8.bf16 %v124
    %v301 = vunpack.c.h.s8.bf16 %v125
    %v302 = vunpack.c.h.s8.bf16 %v126
    %v303 = vunpack.c.h.s8.bf16 %v127
    %v304 = vunpack.c.h.s8.bf16 %v128
    %v305 = vunpack.c.h.s8.bf16 %v129
    %v306 = vunpack.c.l.s8.bf16 %v130
    %v307 = vunpack.c.l.s8.bf16 %v131
    %v308 = vunpack.c.l.s8.bf16 %v132
    %v309 = vunpack.c.l.s8.bf16 %v133
    %v310 = vunpack.c.l.s8.bf16 %v134
    %v311 = vunpack.c.l.s8.bf16 %v135
    %v312 = vunpack.c.l.s8.bf16 %v136
    %v313 = vunpack.c.l.s8.bf16 %v137
    %v314 = vunpack.c.h.s8.bf16 %v130
    %v315 = vunpack.c.h.s8.bf16 %v131
    %v316 = vunpack.c.h.s8.bf16 %v132
    %v317 = vunpack.c.h.s8.bf16 %v133
    %v318 = vunpack.c.h.s8.bf16 %v134
    %v319 = vunpack.c.h.s8.bf16 %v135
    %v320 = vunpack.c.h.s8.bf16 %v136
    %v321 = vunpack.c.h.s8.bf16 %v137
    %v322 = vunpack.c.l.s8.bf16 %v138
    %v323 = vunpack.c.l.s8.bf16 %v139
    %v324 = vunpack.c.l.s8.bf16 %v140
    %v325 = vunpack.c.l.s8.bf16 %v141
    %v326 = vunpack.c.l.s8.bf16 %v142
    %v327 = vunpack.c.l.s8.bf16 %v143
    %v328 = vunpack.c.l.s8.bf16 %v144
    %v329 = vunpack.c.l.s8.bf16 %v145
    %v330 = vunpack.c.h.s8.bf16 %v138
    %v331 = vunpack.c.h.s8.bf16 %v139
    %v332 = vunpack.c.h.s8.bf16 %v140
    %v333 = vunpack.c.h.s8.bf16 %v141
    %v334 = vunpack.c.h.s8.bf16 %v142
    %v335 = vunpack.c.h.s8.bf16 %v143
    %v336 = vunpack.c.h.s8.bf16 %v144
    %v337 = vunpack.c.h.s8.bf16 %v145
    %v338 = vunpack.c.l.s8.bf16 %v146
    %v339 = vunpack.c.l.s8.bf16 %v147
    %v340 = vunpack.c.l.s8.bf16 %v148
    %v341 = vunpack.c.l.s8.bf16 %v149
    %v342 = vunpack.c.l.s8.bf16 %v150
    %v343 = vunpack.c.l.s8.bf16 %v151
    %v344 = vunpack.c.l.s8.bf16 %v152
    %v345 = vunpack.c.l.s8.bf16 %v153
    %v346 = vunpack.c.h.s8.bf16 %v146
    %v347 = vunpack.c.h.s8.bf16 %v147
    %v348 = vunpack.c.h.s8.bf16 %v148
    %v349 = vunpack.c.h.s8.bf16 %v149
    %v350 = vunpack.c.h.s8.bf16 %v150
    %v351 = vunpack.c.h.s8.bf16 %v151
    %v352 = vunpack.c.h.s8.bf16 %v152
    %v353 = vunpack.c.h.s8.bf16 %v153
    %v354 = vunpack.c.l.s8.bf16 %v154
    %v355 = vunpack.c.l.s8.bf16 %v155
    %v356 = vunpack.c.l.s8.bf16 %v156
    %v357 = vunpack.c.l.s8.bf16 %v157
    %v358 = vunpack.c.l.s8.bf16 %v158
    %v359 = vunpack.c.l.s8.bf16 %v159
    %v360 = vunpack.c.l.s8.bf16 %v160
    %v361 = vunpack.c.l.s8.bf16 %v161
    %v362 = vunpack.c.h.s8.bf16 %v154
    %v363 = vunpack.c.h.s8.bf16 %v155
    %v364 = vunpack.c.h.s8.bf16 %v156
    %v365 = vunpack.c.h.s8.bf16 %v157
    %v366 = vunpack.c.h.s8.bf16 %v158
    %v367 = vunpack.c.h.s8.bf16 %v159
    %v368 = vunpack.c.h.s8.bf16 %v160
    %v369 = vunpack.c.h.s8.bf16 %v161
    %v370 = vunpack.c.l.s8.bf16 %v162
    %v371 = vunpack.c.l.s8.bf16 %v163
    %v372 = vunpack.c.l.s8.bf16 %v164
    %v373 = vunpack.c.l.s8.bf16 %v165
    %v374 = vunpack.c.l.s8.bf16 %v166
    %v375 = vunpack.c.l.s8.bf16 %v167
    %v376 = vunpack.c.l.s8.bf16 %v168
    %v377 = vunpack.c.l.s8.bf16 %v169
    %v378 = vunpack.c.h.s8.bf16 %v162
    %v379 = vunpack.c.h.s8.bf16 %v163
    %v380 = vunpack.c.h.s8.bf16 %v164
    %v381 = vunpack.c.h.s8.bf16 %v165
    %v382 = vunpack.c.h.s8.bf16 %v166
    %v383 = vunpack.c.h.s8.bf16 %v167
    %v384 = vunpack.c.h.s8.bf16 %v168
    %v385 = vunpack.c.h.s8.bf16 %v169
    %v386 = vunpack.c.l.s8.bf16 %v170
    %v387 = vunpack.c.l.s8.bf16 %v171
    %v388 = vunpack.c.l.s8.bf16 %v172
    %v389 = vunpack.c.l.s8.bf16 %v173
    %v390 = vunpack.c.l.s8.bf16 %v174
    %v391 = vunpack.c.l.s8.bf16 %v175
    %v392 = vunpack.c.l.s8.bf16 %v176
    %v393 = vunpack.c.l.s8.bf16 %v177
    %v394 = vunpack.c.h.s8.bf16 %v170
    %v395 = vunpack.c.h.s8.bf16 %v171
    %v396 = vunpack.c.h.s8.bf16 %v172
    %v397 = vunpack.c.h.s8.bf16 %v173
    %v398 = vunpack.c.h.s8.bf16 %v174
    %v399 = vunpack.c.h.s8.bf16 %v175
    %v400 = vunpack.c.h.s8.bf16 %v176
    %v401 = vunpack.c.h.s8.bf16 %v177
    %v402 = vunpack.c.l.s8.bf16 %v178
    %v403 = vunpack.c.l.s8.bf16 %v179
    %v404 = vunpack.c.l.s8.bf16 %v180
    %v405 = vunpack.c.l.s8.bf16 %v181
    %v406 = vunpack.c.l.s8.bf16 %v182
    %v407 = vunpack.c.l.s8.bf16 %v183
    %v408 = vunpack.c.l.s8.bf16 %v184
    %v409 = vunpack.c.l.s8.bf16 %v185
    %v410 = vunpack.c.h.s8.bf16 %v178
    %v411 = vunpack.c.h.s8.bf16 %v179
    %v412 = vunpack.c.h.s8.bf16 %v180
    %v413 = vunpack.c.h.s8.bf16 %v181
    %v414 = vunpack.c.h.s8.bf16 %v182
    %v415 = vunpack.c.h.s8.bf16 %v183
    %v416 = vunpack.c.h.s8.bf16 %v184
    %v417 = vunpack.c.h.s8.bf16 %v185
    %v418 = vunpack.c.l.s8.bf16 %v186
    %v419 = vunpack.c.l.s8.bf16 %v187
    %v420 = vunpack.c.l.s8.bf16 %v188
    %v421 = vunpack.c.l.s8.bf16 %v189
    %v422 = vunpack.c.l.s8.bf16 %v190
    %v423 = vunpack.c.l.s8.bf16 %v191
    %v424 = vunpack.c.l.s8.bf16 %v192
    %v425 = vunpack.c.l.s8.bf16 %v193
    %v426 = vunpack.c.h.s8.bf16 %v186
    %v427 = vunpack.c.h.s8.bf16 %v187
    %v428 = vunpack.c.h.s8.bf16 %v188
    %v429 = vunpack.c.h.s8.bf16 %v189
    %v430 = vunpack.c.h.s8.bf16 %v190
    %v431 = vunpack.c.h.s8.bf16 %v191
    %v432 = vunpack.c.h.s8.bf16 %v192
    %v433 = vunpack.c.h.s8.bf16 %v193
    %v434 = vunpack.c.l.s8.bf16 %v194
    %v435 = vunpack.c.l.s8.bf16 %v195
    %v436 = vunpack.c.l.s8.bf16 %v196
    %v437 = vunpack.c.l.s8.bf16 %v197
    %v438 = vunpack.c.l.s8.bf16 %v198
    %v439 = vunpack.c.l.s8.bf16 %v199
    %v440 = vunpack.c.l.s8.bf16 %v200
    %v441 = vunpack.c.l.s8.bf16 %v201
    %v442 = vunpack.c.h.s8.bf16 %v194
    %v443 = vunpack.c.h.s8.bf16 %v195
    %v444 = vunpack.c.h.s8.bf16 %v196
    %v445 = vunpack.c.h.s8.bf16 %v197
    %v446 = vunpack.c.h.s8.bf16 %v198
    %v447 = vunpack.c.h.s8.bf16 %v199
    %v448 = vunpack.c.h.s8.bf16 %v200
    %v449 = vunpack.c.h.s8.bf16 %v201
    %v450 = vunpack.c.l.s8.bf16 %v202
    %v451 = vunpack.c.l.s8.bf16 %v203
    %v452 = vunpack.c.l.s8.bf16 %v204
    %v453 = vunpack.c.l.s8.bf16 %v205
    %v454 = vunpack.c.l.s8.bf16 %v206
    %v455 = vunpack.c.l.s8.bf16 %v207
    %v456 = vunpack.c.l.s8.bf16 %v208
    %v457 = vunpack.c.l.s8.bf16 %v209
    %v458 = vunpack.c.h.s8.bf16 %v202
    %v459 = vunpack.c.h.s8.bf16 %v203
    %v460 = vunpack.c.h.s8.bf16 %v204
    %v461 = vunpack.c.h.s8.bf16 %v205
    %v462 = vunpack.c.h.s8.bf16 %v206
    %v463 = vunpack.c.h.s8.bf16 %v207
    %v464 = vunpack.c.h.s8.bf16 %v208
    %v465 = vunpack.c.h.s8.bf16 %v209
    %466 = vmatprep.subr.bf16.mxu0 %v267
    %467 = vmatpush1.bf16.msra.mxu0 %v266
    %468 = vmatprep.subr.bf16.mxu0 %v259
    %469 = vmatpush1.bf16.msra.mxu0 %v258
    %470 = vmatprep.subr.bf16.mxu0 %v251
    %471 = vmatpush1.bf16.msra.mxu0 %v250
    %472 = vmatprep.subr.bf16.mxu0 %v243
    %473 = vmatpush1.bf16.msra.mxu0 %v242
    %474 = vmatprep.subr.bf16.mxu0 %v235
    %475 = vmatpush1.bf16.msra.mxu0 %v234
    %476 = vmatprep.subr.bf16.mxu0 %v227
    %477 = vmatpush1.bf16.msra.mxu0 %v226
    %478 = vmatprep.subr.bf16.mxu0 %v219
    %479 = vmatpush1.bf16.msra.mxu0 %v218
    %480 = vmatprep.subr.bf16.mxu0 %v211
    %481 = vmatpush1.bf16.msra.mxu0 %v210
    %482 = vmatprep.subr.bf16.mxu0 %v331
    %483 = vmatpush2.bf16.msra.mxu0 %v330
    %484 = vmatprep.subr.bf16.mxu0 %v323
    %485 = vmatpush2.bf16.msra.mxu0 %v322
    %486 = vmatprep.subr.bf16.mxu0 %v315
    %487 = vmatpush2.bf16.msra.mxu0 %v314
    %488 = vmatprep.subr.bf16.mxu0 %v307
    %489 = vmatpush2.bf16.msra.mxu0 %v306
    %490 = vmatprep.subr.bf16.mxu0 %v299
    %491 = vmatpush2.bf16.msra.mxu0 %v298
    %492 = vmatprep.subr.bf16.mxu0 %v291
    %493 = vmatpush2.bf16.msra.mxu0 %v290
    %494 = vmatprep.subr.bf16.mxu0 %v283
    %495 = vmatpush2.bf16.msra.mxu0 %v282
    %496 = vmatprep.subr.bf16.mxu0 %v275
    %497 = vmatpush2.bf16.msra.mxu0 %v274
    %498 = vmatprep.mubr.bf16.mxu0 %v79
    %499 = vmatmul.mubr.bf16.gmra.mxu0 %v78
    %v500 = vpop.f32.mrf.mxu0
    %v501 = vadd.f32 0.0, %v500
    %v502 = vpop.f32.mrf.mxu0
    %v503 = vadd.f32 0.0, %v502
    %v504 = vpop.f32.mrf.mxu0
    %v505 = vpop.f32.mrf.mxu0
    %506 = vdwg.mxu0
    %507 = vmatprep.subr.bf16.mxu0 %v395
    %508 = vmatpush1.bf16.msra.mxu0 %v394
    %509 = vmatprep.subr.bf16.mxu0 %v387
    %510 = vmatpush1.bf16.msra.mxu0 %v386
    %511 = vmatprep.subr.bf16.mxu0 %v379
    %512 = vmatpush1.bf16.msra.mxu0 %v378
    %513 = vmatprep.subr.bf16.mxu0 %v371
    %514 = vmatpush1.bf16.msra.mxu0 %v370
    %515 = vmatprep.subr.bf16.mxu0 %v363
    %516 = vmatpush1.bf16.msra.mxu0 %v362
    %517 = vmatprep.subr.bf16.mxu0 %v355
    %518 = vmatpush1.bf16.msra.mxu0 %v354
    %519 = vmatprep.subr.bf16.mxu0 %v347
    %520 = vmatpush1.bf16.msra.mxu0 %v346
    %521 = vmatprep.subr.bf16.mxu0 %v339
    %522 = vmatpush1.bf16.msra.mxu0 %v338
    %523 = vmatprep.subr.bf16.mxu0 %v459
    %524 = vmatpush2.bf16.msra.mxu0 %v458
    %525 = vmatprep.subr.bf16.mxu0 %v451
    %526 = vmatpush2.bf16.msra.mxu0 %v450
    %527 = vmatprep.subr.bf16.mxu0 %v443
    %528 = vmatpush2.bf16.msra.mxu0 %v442
    %529 = vmatprep.subr.bf16.mxu0 %v435
    %530 = vmatpush2.bf16.msra.mxu0 %v434
    %531 = vmatprep.subr.bf16.mxu0 %v427
    %532 = vmatpush2.bf16.msra.mxu0 %v426
    %533 = vmatprep.subr.bf16.mxu0 %v419
    %534 = vmatpush2.bf16.msra.mxu0 %v418
    %535 = vmatprep.subr.bf16.mxu0 %v411
    %536 = vmatpush2.bf16.msra.mxu0 %v410
    %537 = vmatprep.subr.bf16.mxu0 %v403
    %538 = vmatpush2.bf16.msra.mxu0 %v402
    %539 = vmatprep.mubr.bf16.mxu0 %v81
    %540 = vmatmul.mubr.bf16.gmra.mxu0 %v80
    %v541 = vpop.f32.mrf.mxu0
    %v542 = vadd.f32 %v501, %v541
    %v543 = vpop.f32.mrf.mxu0
    %v544 = vadd.f32 %v503, %v543
    %v545 = vpop.f32.mrf.mxu0
    %v546 = vpop.f32.mrf.mxu0
    %547 = vdwg.mxu0
    %548 = vmatprep.subr.bf16.mxu0 %v269
    %549 = vmatpush1.bf16.msra.mxu0 %v268
    %550 = vmatprep.subr.bf16.mxu0 %v261
    %551 = vmatpush1.bf16.msra.mxu0 %v260
    %552 = vmatprep.subr.bf16.mxu0 %v253
    %553 = vmatpush1.bf16.msra.mxu0 %v252
    %554 = vmatprep.subr.bf16.mxu0 %v245
    %555 = vmatpush1.bf16.msra.mxu0 %v244
    %556 = vmatprep.subr.bf16.mxu0 %v237
    %557 = vmatpush1.bf16.msra.mxu0 %v236
    %558 = vmatprep.subr.bf16.mxu0 %v229
    %559 = vmatpush1.bf16.msra.mxu0 %v228
    %560 = vmatprep.subr.bf16.mxu0 %v221
    %561 = vmatpush1.bf16.msra.mxu0 %v220
    %562 = vmatprep.subr.bf16.mxu0 %v213
    %563 = vmatpush1.bf16.msra.mxu0 %v212
    %564 = vmatprep.subr.bf16.mxu0 %v333
    %565 = vmatpush2.bf16.msra.mxu0 %v332
    %566 = vmatprep.subr.bf16.mxu0 %v325
    %567 = vmatpush2.bf16.msra.mxu0 %v324
    %568 = vmatprep.subr.bf16.mxu0 %v317
    %569 = vmatpush2.bf16.msra.mxu0 %v316
    %570 = vmatprep.subr.bf16.mxu0 %v309
    %571 = vmatpush2.bf16.msra.mxu0 %v308
    %572 = vmatprep.subr.bf16.mxu0 %v301
    %573 = vmatpush2.bf16.msra.mxu0 %v300
    %574 = vmatprep.subr.bf16.mxu0 %v293
    %575 = vmatpush2.bf16.msra.mxu0 %v292
    %576 = vmatprep.subr.bf16.mxu0 %v285
    %577 = vmatpush2.bf16.msra.mxu0 %v284
    %578 = vmatprep.subr.bf16.mxu0 %v277
    %579 = vmatpush2.bf16.msra.mxu0 %v276
    %580 = vmatprep.mubr.bf16.mxu0 %v79
    %581 = vmatmul.mubr.bf16.gmra.mxu0 %v78
    %v582 = vpop.f32.mrf.mxu0
    %v583 = vadd.f32 0.0, %v582
    %v584 = vpop.f32.mrf.mxu0
    %v585 = vadd.f32 0.0, %v584
    %v586 = vpop.f32.mrf.mxu0
    %v587 = vpop.f32.mrf.mxu0
    %588 = vdwg.mxu0
    %589 = vmatprep.subr.bf16.mxu0 %v397
    %590 = vmatpush1.bf16.msra.mxu0 %v396
    %591 = vmatprep.subr.bf16.mxu0 %v389
    %592 = vmatpush1.bf16.msra.mxu0 %v388
    %593 = vmatprep.subr.bf16.mxu0 %v381
    %594 = vmatpush1.bf16.msra.mxu0 %v380
    %595 = vmatprep.subr.bf16.mxu0 %v373
    %596 = vmatpush1.bf16.msra.mxu0 %v372
    %597 = vmatprep.subr.bf16.mxu0 %v365
    %598 = vmatpush1.bf16.msra.mxu0 %v364
    %599 = vmatprep.subr.bf16.mxu0 %v357
    %600 = vmatpush1.bf16.msra.mxu0 %v356
    %601 = vmatprep.subr.bf16.mxu0 %v349
    %602 = vmatpush1.bf16.msra.mxu0 %v348
    %603 = vmatprep.subr.bf16.mxu0 %v341
    %604 = vmatpush1.bf16.msra.mxu0 %v340
    %605 = vmatprep.subr.bf16.mxu0 %v461
    %606 = vmatpush2.bf16.msra.mxu0 %v460
    %607 = vmatprep.subr.bf16.mxu0 %v453
    %608 = vmatpush2.bf16.msra.mxu0 %v452
    %609 = vmatprep.subr.bf16.mxu0 %v445
    %610 = vmatpush2.bf16.msra.mxu0 %v444
    %611 = vmatprep.subr.bf16.mxu0 %v437
    %612 = vmatpush2.bf16.msra.mxu0 %v436
    %613 = vmatprep.subr.bf16.mxu0 %v429
    %614 = vmatpush2.bf16.msra.mxu0 %v428
    %615 = vmatprep.subr.bf16.mxu0 %v421
    %616 = vmatpush2.bf16.msra.mxu0 %v420
    %617 = vmatprep.subr.bf16.mxu0 %v413
    %618 = vmatpush2.bf16.msra.mxu0 %v412
    %619 = vmatprep.subr.bf16.mxu0 %v405
    %620 = vmatpush2.bf16.msra.mxu0 %v404
    %621 = vmatprep.mubr.bf16.mxu0 %v81
    %622 = vmatmul.mubr.bf16.gmra.mxu0 %v80
    %v623 = vpop.f32.mrf.mxu0
    %v624 = vadd.f32 %v583, %v623
    %v625 = vpop.f32.mrf.mxu0
    %v626 = vadd.f32 %v585, %v625
    %v627 = vpop.f32.mrf.mxu0
    %v628 = vpop.f32.mrf.mxu0
    %629 = vdwg.mxu0
    %630 = vmatprep.subr.bf16.mxu0 %v271
    %631 = vmatpush1.bf16.msra.mxu0 %v270
    %632 = vmatprep.subr.bf16.mxu0 %v263
    %633 = vmatpush1.bf16.msra.mxu0 %v262
    %634 = vmatprep.subr.bf16.mxu0 %v255
    %635 = vmatpush1.bf16.msra.mxu0 %v254
    %636 = vmatprep.subr.bf16.mxu0 %v247
    %637 = vmatpush1.bf16.msra.mxu0 %v246
    %638 = vmatprep.subr.bf16.mxu0 %v239
    %639 = vmatpush1.bf16.msra.mxu0 %v238
    %640 = vmatprep.subr.bf16.mxu0 %v231
    %641 = vmatpush1.bf16.msra.mxu0 %v230
    %642 = vmatprep.subr.bf16.mxu0 %v223
    %643 = vmatpush1.bf16.msra.mxu0 %v222
    %644 = vmatprep.subr.bf16.mxu0 %v215
    %645 = vmatpush1.bf16.msra.mxu0 %v214
    %646 = vmatprep.subr.bf16.mxu0 %v335
    %647 = vmatpush2.bf16.msra.mxu0 %v334
    %648 = vmatprep.subr.bf16.mxu0 %v327
    %649 = vmatpush2.bf16.msra.mxu0 %v326
    %650 = vmatprep.subr.bf16.mxu0 %v319
    %651 = vmatpush2.bf16.msra.mxu0 %v318
    %652 = vmatprep.subr.bf16.mxu0 %v311
    %653 = vmatpush2.bf16.msra.mxu0 %v310
    %654 = vmatprep.subr.bf16.mxu0 %v303
    %655 = vmatpush2.bf16.msra.mxu0 %v302
    %656 = vmatprep.subr.bf16.mxu0 %v295
    %657 = vmatpush2.bf16.msra.mxu0 %v294
    %658 = vmatprep.subr.bf16.mxu0 %v287
    %659 = vmatpush2.bf16.msra.mxu0 %v286
    %660 = vmatprep.subr.bf16.mxu0 %v279
    %661 = vmatpush2.bf16.msra.mxu0 %v278
    %662 = vmatprep.mubr.bf16.mxu0 %v79
    %663 = vmatmul.mubr.bf16.gmra.mxu0 %v78
    %v664 = vpop.f32.mrf.mxu0
    %v665 = vadd.f32 0.0, %v664
    %v666 = vpop.f32.mrf.mxu0
    %v667 = vadd.f32 0.0, %v666
    %v668 = vpop.f32.mrf.mxu0
    %v669 = vpop.f32.mrf.mxu0
    %670 = vdwg.mxu0
    %671 = vmatprep.subr.bf16.mxu0 %v399
    %672 = vmatpush1.bf16.msra.mxu0 %v398
    %673 = vmatprep.subr.bf16.mxu0 %v391
    %674 = vmatpush1.bf16.msra.mxu0 %v390
    %675 = vmatprep.subr.bf16.mxu0 %v383
    %676 = vmatpush1.bf16.msra.mxu0 %v382
    %677 = vmatprep.subr.bf16.mxu0 %v375
    %678 = vmatpush1.bf16.msra.mxu0 %v374
    %679 = vmatprep.subr.bf16.mxu0 %v367
    %680 = vmatpush1.bf16.msra.mxu0 %v366
    %681 = vmatprep.subr.bf16.mxu0 %v359
    %682 = vmatpush1.bf16.msra.mxu0 %v358
    %683 = vmatprep.subr.bf16.mxu0 %v351
    %684 = vmatpush1.bf16.msra.mxu0 %v350
    %685 = vmatprep.subr.bf16.mxu0 %v343
    %686 = vmatpush1.bf16.msra.mxu0 %v342
    %687 = vmatprep.subr.bf16.mxu0 %v463
    %688 = vmatpush2.bf16.msra.mxu0 %v462
    %689 = vmatprep.subr.bf16.mxu0 %v455
    %690 = vmatpush2.bf16.msra.mxu0 %v454
    %691 = vmatprep.subr.bf16.mxu0 %v447
    %692 = vmatpush2.bf16.msra.mxu0 %v446
    %693 = vmatprep.subr.bf16.mxu0 %v439
    %694 = vmatpush2.bf16.msra.mxu0 %v438
    %695 = vmatprep.subr.bf16.mxu0 %v431
    %696 = vmatpush2.bf16.msra.mxu0 %v430
    %697 = vmatprep.subr.bf16.mxu0 %v423
    %698 = vmatpush2.bf16.msra.mxu0 %v422
    %699 = vmatprep.subr.bf16.mxu0 %v415
    %700 = vmatpush2.bf16.msra.mxu0 %v414
    %701 = vmatprep.subr.bf16.mxu0 %v407
    %702 = vmatpush2.bf16.msra.mxu0 %v406
    %703 = vmatprep.mubr.bf16.mxu0 %v81
    %704 = vmatmul.mubr.bf16.gmra.mxu0 %v80
    %v705 = vpop.f32.mrf.mxu0
    %v706 = vadd.f32 %v665, %v705
    %v707 = vpop.f32.mrf.mxu0
    %v708 = vadd.f32 %v667, %v707
    %v709 = vpop.f32.mrf.mxu0
    %v710 = vpop.f32.mrf.mxu0
    %711 = vdwg.mxu0
    %712 = vmatprep.subr.bf16.mxu0 %v273
    %713 = vmatpush1.bf16.msra.mxu0 %v272
    %714 = vmatprep.subr.bf16.mxu0 %v265
    %715 = vmatpush1.bf16.msra.mxu0 %v264
    %716 = vmatprep.subr.bf16.mxu0 %v257
    %717 = vmatpush1.bf16.msra.mxu0 %v256
    %718 = vmatprep.subr.bf16.mxu0 %v249
    %719 = vmatpush1.bf16.msra.mxu0 %v248
    %720 = vmatprep.subr.bf16.mxu0 %v241
    %721 = vmatpush1.bf16.msra.mxu0 %v240
    %722 = vmatprep.subr.bf16.mxu0 %v233
    %723 = vmatpush1.bf16.msra.mxu0 %v232
    %724 = vmatprep.subr.bf16.mxu0 %v225
    %725 = vmatpush1.bf16.msra.mxu0 %v224
    %726 = vmatprep.subr.bf16.mxu0 %v217
    %727 = vmatpush1.bf16.msra.mxu0 %v216
    %728 = vmatprep.subr.bf16.mxu0 %v337
    %729 = vmatpush2.bf16.msra.mxu0 %v336
    %730 = vmatprep.subr.bf16.mxu0 %v329
    %731 = vmatpush2.bf16.msra.mxu0 %v328
    %732 = vmatprep.subr.bf16.mxu0 %v321
    %733 = vmatpush2.bf16.msra.mxu0 %v320
    %734 = vmatprep.subr.bf16.mxu0 %v313
    %735 = vmatpush2.bf16.msra.mxu0 %v312
    %736 = vmatprep.subr.bf16.mxu0 %v305
    %737 = vmatpush2.bf16.msra.mxu0 %v304
    %738 = vmatprep.subr.bf16.mxu0 %v297
    %739 = vmatpush2.bf16.msra.mxu0 %v296
    %740 = vmatprep.subr.bf16.mxu0 %v289
    %741 = vmatpush2.bf16.msra.mxu0 %v288
    %742 = vmatprep.subr.bf16.mxu0 %v281
    %743 = vmatpush2.bf16.msra.mxu0 %v280
    %744 = vmatprep.mubr.bf16.mxu0 %v79
    %745 = vmatmul.mubr.bf16.gmra.mxu0 %v78
    %v746 = vpop.f32.mrf.mxu0
    %v747 = vadd.f32 0.0, %v746
    %v748 = vpop.f32.mrf.mxu0
    %v749 = vadd.f32 0.0, %v748
    %v750 = vpop.f32.mrf.mxu0
    %v751 = vpop.f32.mrf.mxu0
    %752 = vdwg.mxu0
    %753 = vmatprep.subr.bf16.mxu0 %v401
    %754 = vmatpush1.bf16.msra.mxu0 %v400
    %755 = vmatprep.subr.bf16.mxu0 %v393
    %756 = vmatpush1.bf16.msra.mxu0 %v392
    %757 = vmatprep.subr.bf16.mxu0 %v385
    %758 = vmatpush1.bf16.msra.mxu0 %v384
    %759 = vmatprep.subr.bf16.mxu0 %v377
    %760 = vmatpush1.bf16.msra.mxu0 %v376
    %761 = vmatprep.subr.bf16.mxu0 %v369
    %762 = vmatpush1.bf16.msra.mxu0 %v368
    %763 = vmatprep.subr.bf16.mxu0 %v361
    %764 = vmatpush1.bf16.msra.mxu0 %v360
    %765 = vmatprep.subr.bf16.mxu0 %v353
    %766 = vmatpush1.bf16.msra.mxu0 %v352
    %767 = vmatprep.subr.bf16.mxu0 %v345
    %768 = vmatpush1.bf16.msra.mxu0 %v344
    %769 = vmatprep.subr.bf16.mxu0 %v465
    %770 = vmatpush2.bf16.msra.mxu0 %v464
    %771 = vmatprep.subr.bf16.mxu0 %v457
    %772 = vmatpush2.bf16.msra.mxu0 %v456
    %773 = vmatprep.subr.bf16.mxu0 %v449
    %774 = vmatpush2.bf16.msra.mxu0 %v448
    %775 = vmatprep.subr.bf16.mxu0 %v441
    %776 = vmatpush2.bf16.msra.mxu0 %v440
    %777 = vmatprep.subr.bf16.mxu0 %v433
    %778 = vmatpush2.bf16.msra.mxu0 %v432
    %779 = vmatprep.subr.bf16.mxu0 %v425
    %780 = vmatpush2.bf16.msra.mxu0 %v424
    %781 = vmatprep.subr.bf16.mxu0 %v417
    %782 = vmatpush2.bf16.msra.mxu0 %v416
    %783 = vmatprep.subr.bf16.mxu0 %v409
    %784 = vmatpush2.bf16.msra.mxu0 %v408
    %785 = vmatprep.mubr.bf16.mxu0 %v81
    %786 = vmatmul.mubr.bf16.gmra.mxu0 %v80
    %v787 = vpop.f32.mrf.mxu0
    %v788 = vadd.f32 %v747, %v787
    %v789 = vpop.f32.mrf.mxu0
    %v790 = vadd.f32 %v749, %v789
    %v791 = vpop.f32.mrf.mxu0
    %v792 = vpop.f32.mrf.mxu0
    %793 = vdwg.mxu0
    %v794 = vld [vmem:[#allocation7] sm:$0xff]
    %v796 = vlaneseq
    %v797 = vshrl.u32 %v796, 7
    %v798 = vsub.s32 0, %v797
    %v799 = vrot.slane %v794, %v798
    %v800 = vlaneseq
    %v801 = vshrl.u32 %v800, 7
    %v802 = vsub.s32 1, %v801
    %v803 = vrot.slane %v794, %v802
    %v804 = vlaneseq
    %v805 = vshrl.u32 %v804, 7
    %v806 = vsub.s32 2, %v805
    %v807 = vrot.slane %v794, %v806
    %v808 = vlaneseq
    %v809 = vshrl.u32 %v808, 7
    %v810 = vsub.s32 3, %v809
    %v811 = vrot.slane %v794, %v810
    %v812 = vlaneseq
    %v813 = vshrl.u32 %v812, 7
    %v814 = vsub.s32 4, %v813
    %v815 = vrot.slane %v794, %v814
    %v816 = vlaneseq
    %v817 = vshrl.u32 %v816, 7
    %v818 = vsub.s32 5, %v817
    %v819 = vrot.slane %v794, %v818
    %v820 = vlaneseq
    %v821 = vshrl.u32 %v820, 7
    %v822 = vsub.s32 6, %v821
    %v823 = vrot.slane %v794, %v822
    %v824 = vlaneseq
    %v825 = vshrl.u32 %v824, 7
    %v826 = vsub.s32 7, %v825
    %v827 = vrot.slane %v794, %v826
    %v836 = vmul.f32 %v542, %v799
    %v837 = vmul.f32 %v544, %v803
    %v838 = vmul.f32 %v624, %v807
    %v839 = vmul.f32 %v626, %v811
    %v840 = vmul.f32 %v706, %v815
    %v841 = vmul.f32 %v708, %v819
    %v842 = vmul.f32 %v788, %v823
    %v843 = vmul.f32 %v790, %v827
    %v844 = vld [vmem:[#allocation8] sm:$0xff]
    %v846 = vlaneseq
    %v847 = vshrl.u32 %v846, 7
    %v848 = vsub.s32 0, %v847
    %v849 = vrot.slane %v844, %v848
    %v850 = vlaneseq
    %v851 = vshrl.u32 %v850, 7
    %v852 = vsub.s32 1, %v851
    %v853 = vrot.slane %v844, %v852
    %v854 = vlaneseq
    %v855 = vshrl.u32 %v854, 7
    %v856 = vsub.s32 2, %v855
    %v857 = vrot.slane %v844, %v856
    %v858 = vlaneseq
    %v859 = vshrl.u32 %v858, 7
    %v860 = vsub.s32 3, %v859
    %v861 = vrot.slane %v844, %v860
    %v862 = vlaneseq
    %v863 = vshrl.u32 %v862, 7
    %v864 = vsub.s32 4, %v863
    %v865 = vrot.slane %v844, %v864
    %v866 = vlaneseq
    %v867 = vshrl.u32 %v866, 7
    %v868 = vsub.s32 5, %v867
    %v869 = vrot.slane %v844, %v868
    %v870 = vlaneseq
    %v871 = vshrl.u32 %v870, 7
    %v872 = vsub.s32 6, %v871
    %v873 = vrot.slane %v844, %v872
    %v874 = vlaneseq
    %v875 = vshrl.u32 %v874, 7
    %v876 = vsub.s32 7, %v875
    %v877 = vrot.slane %v844, %v876
    %v886 = vadd.f32 %v836, %v849
    %v887 = vadd.f32 %v837, %v853
    %v888 = vadd.f32 %v838, %v857
    %v889 = vadd.f32 %v839, %v861
    %v890 = vadd.f32 %v840, %v865
    %v891 = vadd.f32 %v841, %v869
    %v892 = vadd.f32 %v842, %v873
    %v893 = vadd.f32 %v843, %v877
    %v894 = vmax.f32 %v886, 0.0
    %v895 = vmax.f32 %v887, 0.0
    %v896 = vmax.f32 %v888, 0.0
    %v897 = vmax.f32 %v889, 0.0
    %v898 = vmax.f32 %v890, 0.0
    %v899 = vmax.f32 %v891, 0.0
    %v900 = vmax.f32 %v892, 0.0
    %v901 = vmax.f32 %v893, 0.0
    %v902 = vld [vmem:[%s4] sm:$0xff]
    %v904 = vlaneseq
    %v905 = vshrl.u32 %v904, 7
    %v906 = vsub.s32 0, %v905
    %v907 = vrot.slane %v902, %v906
    %v908 = vlaneseq
    %v909 = vshrl.u32 %v908, 7
    %v910 = vsub.s32 1, %v909
    %v911 = vrot.slane %v902, %v910
    %v912 = vlaneseq
    %v913 = vshrl.u32 %v912, 7
    %v914 = vsub.s32 2, %v913
    %v915 = vrot.slane %v902, %v914
    %v916 = vlaneseq
    %v917 = vshrl.u32 %v916, 7
    %v918 = vsub.s32 3, %v917
    %v919 = vrot.slane %v902, %v918
    %v920 = vlaneseq
    %v921 = vshrl.u32 %v920, 7
    %v922 = vsub.s32 4, %v921
    %v923 = vrot.slane %v902, %v922
    %v924 = vlaneseq
    %v925 = vshrl.u32 %v924, 7
    %v926 = vsub.s32 5, %v925
    %v927 = vrot.slane %v902, %v926
    %v928 = vlaneseq
    %v929 = vshrl.u32 %v928, 7
    %v930 = vsub.s32 6, %v929
    %v931 = vrot.slane %v902, %v930
    %v932 = vlaneseq
    %v933 = vshrl.u32 %v932, 7
    %v934 = vsub.s32 7, %v933
    %v935 = vrot.slane %v902, %v934
    %v944 = vmul.f32 %v894, %v907
    %v945 = vmul.f32 %v895, %v911
    %v946 = vmul.f32 %v896, %v915
    %v947 = vmul.f32 %v897, %v919
    %v948 = vmul.f32 %v898, %v923
    %v949 = vmul.f32 %v899, %v927
    %v950 = vmul.f32 %v900, %v931
    %v951 = vmul.f32 %v901, %v935
    %v952 = vadd.f32 %v944, %v945
    %v953 = vadd.f32 %v952, %v946
    %v954 = vadd.f32 %v953, %v947
    %v955 = vadd.f32 %v954, %v948
    %v956 = vadd.f32 %v955, %v949
    %v957 = vadd.f32 %v956, %v950
    %v958 = vadd.f32 %v957, %v951
    %959 = vadd.xlane.f32.xlu0 %v958
    %v960 = vpop.xlane.xlu0 %959
    %v961 = vld [vmem:[#allocation2] sm:$0x1]
    %v963 = vlaneseq
    %v964 = vshrl.u32 %v963, 7
    %v965 = vsub.s32 0, %v964
    %v966 = vrot.slane %v961, %v965
    %v968 = vadd.f32 %v960, %v966
    %v969 = vxor.u32 %v968, 2147483648
    %v970 = vmul.f32 %v969, 1.442695
    %v971 = vpow.pop %v970
    %v972 = vadd.f32 %v971, 1.0
    %v973 = vrcp.pop %v972
    %v974 = vmul.f32 1.0, %v973
    %vm975 = vcmask 7168
    %976 = vst.msk [vmem:[%s6] sm:$0xff] %vm975, %v974
    // Predicated region
    $region42: #{tpu_custom_call.1} parent=1 // pred_check
      _
    $region43: #{tpu_custom_call.1} parent=1 // pred_check_branch
      %978 = sbr.rel (0) target = $region45
    $region44: #{tpu_custom_call.1} parent=1 // pred_region
      _
    $region45: #{tpu_custom_call.1} parent=1 // pred_fallthru
      _
    // Predicated region
    $region46: #{tpu_custom_call.1} parent=1 // pred_check
      _
    $region47: #{tpu_custom_call.1} parent=1 // pred_check_branch
      %980 = sbr.rel (0) target = $region49
    $region48: #{tpu_custom_call.1} parent=1 // pred_region
      _
    $region49: #{tpu_custom_call.1} parent=1 // pred_fallthru
      _
    %981 = vsyncpa [#allocation4], 1
    %982 = vsyncpa [#allocation6], 1
    %983 = vsyncpa [#allocation9], 1

</llo_original>
